<compile_context>
chip_gen: v7x
topology: tpu7x:2x2x1
jax: 0.10.0
libtpu: 0.0.40
codegen_flags: <defaults>
</compile_context>

<pallas_src>
import math

import numpy as np

import jax
import jax.numpy as jnp
from jax.experimental import pallas as pl
from jax.experimental.pallas import tpu as pltpu


def _sinc_resample_taps(orig_freq, new_freq, lowpass_filter_width=6, rolloff=0.99):
    """Sinc-interpolation (hann-windowed) taps, matching torchaudio's
    _get_sinc_resample_kernel for gcd-reduced (orig_freq, new_freq)."""
    base_freq = min(orig_freq, new_freq) * rolloff
    width = int(math.ceil(lowpass_filter_width * orig_freq / base_freq))
    idx = np.arange(-width, width + orig_freq, dtype=np.float64) / orig_freq     # (K,)
    t = (np.arange(0, -new_freq, -1, dtype=np.float64)[:, None] / new_freq
         + idx[None, :])                                                          # (new, K)
    t = t * base_freq
    t = np.clip(t, -lowpass_filter_width, lowpass_filter_width)
    window = np.cos(t * math.pi / lowpass_filter_width / 2.0) ** 2
    t = t * math.pi
    scale = base_freq / orig_freq
    safe_t = np.where(t == 0.0, 1.0, t)
    taps = np.where(t == 0.0, 1.0, np.sin(safe_t) / safe_t)
    taps = taps * window * scale
    return taps.astype(np.float32), width                                         # (new, K), int


def _make_fir_decimate_kernel(w_sq, l_out):
    """w_sq: numpy (S, Q) polyphase taps (compile-time constants)."""
    S, Q = w_sq.shape

    def kernel(xph_ref, o_ref):
        # xph_ref: (S, TR, F) VMEM block, time (F) lane-dense.
        # o_ref  : (TR, L_out) VMEM block, time lane-dense.
        acc = jnp.zeros(o_ref.shape, jnp.float32)
        for s in range(S):
            xs = xph_ref[s].astype(jnp.float32)           # (TR, F)
            for q in range(Q):
                c = float(w_sq[s, q])
                if c != 0.0:                              # skip zero-padded taps
                    # static lane-shifted window FMA on the VPU
                    acc = acc + c * xs[:, q:q + l_out]
        o_ref[...] = acc.astype(o_ref.dtype)

    return kernel


def downsample(x, S, N=4096, lowpass_filter_width=6, rolloff=0.99, block_rows=None):
    """Pallas equivalent of torchaudio.transforms.Resample(N, N/S)(x).

    x: (..., L). Resamples along the last axis. Supports integer decimation
    factors (N/S integer with gcd reduction to new_freq == 1)."""
    orig, new = int(N), int(N / S)
    g = math.gcd(orig, new)
    o, n = orig // g, new // g
    if n != 1:
        # TODO(synk): general rational ratios (reduced new_freq > 1) not implemented.
        raise NotImplementedError("Pallas Downsample supports integer decimation factors only")

    taps, width = _sinc_resample_taps(o, n, lowpass_filter_width, rolloff)
    K = taps.shape[-1]                       # 2*width + o
    Q = -(-K // o)                           # taps per phase (zero-padded to Q*o)
    w_sq = np.zeros((o, Q), np.float32)      # tap k = q*o + s  ->  w_sq[s, q]
    for k in range(K):
        w_sq[k % o, k // o] = taps[0, k]

    shape = x.shape
    L = shape[-1]
    L_out = -(-L // o)                       # ceil(L / S): torchaudio target_length
    F = L_out + Q                            # frames needed (incl. halo for the FIR)
    R = int(np.prod(shape[:-1])) if len(shape) > 1 else 1
    x2 = x.reshape(R, L)

    # Row tiling: multiple of 8 sublanes, grown while VMEM stays comfortable.
    row_bytes = (o * F + L_out) * 4
    if block_rows is None:
        tr = 8
        while tr < 1024 and tr * 2 * row_bytes * 4 <= 4 * 2**20 and R >= tr * 4:
            tr *= 2
        block_rows = tr
    Rp = -(-R // block_rows) * block_rows

    # Zero-pad: `width` on the left (torchaudio), right up to F full frames,
    # rows up to a multiple of block_rows.  Then phase-decompose so that the
    # time axis stays lane-dense inside the kernel.
    Lp = F * o
    xpad = jnp.pad(x2, ((0, Rp - R), (width, Lp - L - width)))
    xph = jnp.transpose(xpad.reshape(Rp, F, o), (2, 0, 1))     # (S, Rp, F)

    kernel = _make_fir_decimate_kernel(w_sq, L_out)
    nnz = int(np.count_nonzero(w_sq))
    cost = pl.CostEstimate(
        flops=2 * Rp * L_out * nnz,
        transcendentals=0,
        bytes_accessed=4 * (o * Rp * F + Rp * L_out),
    )

    out2 = pl.pallas_call(
        kernel,
        out_shape=jax.ShapeDtypeStruct((Rp, L_out), x.dtype),
        grid_spec=pltpu.PrefetchScalarGridSpec(
            num_scalar_prefetch=0,
            grid=(Rp // block_rows,),
            in_specs=[
                pl.BlockSpec((o, block_rows, F), lambda i: (0, i, 0)),
            ],
            out_specs=pl.BlockSpec((block_rows, L_out), lambda i: (i, 0)),
        ),
        compiler_params=pltpu.CompilerParams(
            dimension_semantics=("parallel",),
        ),
        cost_estimate=cost,
    )(xph)

    return out2[:R].reshape(shape[:-1] + (L_out,))


def _reference(x, S, N=4096, lowpass_filter_width=6, rolloff=0.99):
    """Pure-JAX reference: same taps, direct windowed dot (decimating FIR)."""
    orig, new = int(N), int(N / S)
    g = math.gcd(orig, new)
    o, n = orig // g, new // g
    taps, width = _sinc_resample_taps(o, n, lowpass_filter_width, rolloff)
    w = jnp.asarray(taps[0])                                    # (K,)
    K = w.shape[0]
    L = x.shape[-1]
    L_out = -(-L // o)
    pad = [(0, 0)] * (x.ndim - 1) + [(width, width + o)]
    xpad = jnp.pad(x, pad)
    idx = jnp.arange(L_out)[:, None] * o + jnp.arange(K)[None, :]
    return jnp.einsum("...jk,k->...j", xpad[..., idx], w)


if __name__ == "__main__":
    key = jax.random.PRNGKey(0)
    B, C, L = 2, 8, 256
    x = jax.random.normal(key, (B, C, L), dtype=jnp.float32)

    ok = True
    for S in (2, 4):
        out = downsample(x, S)
        out = jax.block_until_ready(out)
        ref = _reference(x, S)
        L_out = -(-L // S)
        assert out.shape == (B, C, L_out), (out.shape, (B, C, L_out))
        assert jnp.allclose(out, ref, atol=1e-5, rtol=1e-5), (
            S, float(jnp.max(jnp.abs(out - ref))))

    if ok:
        print("KERNEL_OK")
</pallas_src>

<mosaic_0001>
module attributes {stable_mosaic.version = 11 : i64} {
  func.func @kernel(%arg0: i32, %arg1: memref<2x8x142xf32, #tpu.memory_space<vmem>>, %arg2: memref<8x128xf32, #tpu.memory_space<vmem>>) attributes {dimension_semantics = [#tpu.dimension_semantics<parallel>], iteration_bounds = array<i64: 2>, scalar_prefetch = 0 : i64, scratch_operands = 0 : i64, tpu.core_type = #tpu.core_type<tc>, window_params = [{transform_indices = @transform_0, window_bounds = array<i64: 2, 8, 142>}, {transform_indices = @transform_1, window_bounds = array<i64: 8, 128>}]} {
    %cst = arith.constant 0.000000e+00 : f32
    %0 = vector.broadcast %cst : f32 to vector<8x128xf32>
    %c0 = arith.constant 0 : index
    %c0_0 = arith.constant 0 : index
    %c0_1 = arith.constant 0 : index
    %1 = vector.load %arg1[%c0, %c0_0, %c0_1] : memref<2x8x142xf32, #tpu.memory_space<vmem>>, vector<1x8x142xf32>
    %2 = vector.shape_cast %1 : vector<1x8x142xf32> to vector<8x142xf32>
    %3 = vector.extract_strided_slice %2 {offsets = [0, 1], sizes = [8, 128], strides = [1, 1]} : vector<8x142xf32> to vector<8x128xf32>
    %cst_2 = arith.constant -5.97594655E-4 : f32
    %4 = vector.broadcast %cst_2 : f32 to vector<8x128xf32>
    %5 = arith.mulf %4, %3 : vector<8x128xf32>
    %6 = arith.addf %0, %5 : vector<8x128xf32>
    %7 = vector.extract_strided_slice %2 {offsets = [0, 2], sizes = [8, 128], strides = [1, 1]} : vector<8x142xf32> to vector<8x128xf32>
    %cst_3 = arith.constant 0.00542291487 : f32
    %8 = vector.broadcast %cst_3 : f32 to vector<8x128xf32>
    %9 = arith.mulf %8, %7 : vector<8x128xf32>
    %10 = arith.addf %6, %9 : vector<8x128xf32>
    %11 = vector.extract_strided_slice %2 {offsets = [0, 3], sizes = [8, 128], strides = [1, 1]} : vector<8x142xf32> to vector<8x128xf32>
    %cst_4 = arith.constant -0.0171510316 : f32
    %12 = vector.broadcast %cst_4 : f32 to vector<8x128xf32>
    %13 = arith.mulf %12, %11 : vector<8x128xf32>
    %14 = arith.addf %10, %13 : vector<8x128xf32>
    %15 = vector.extract_strided_slice %2 {offsets = [0, 4], sizes = [8, 128], strides = [1, 1]} : vector<8x142xf32> to vector<8x128xf32>
    %cst_5 = arith.constant 0.0403464474 : f32
    %16 = vector.broadcast %cst_5 : f32 to vector<8x128xf32>
    %17 = arith.mulf %16, %15 : vector<8x128xf32>
    %18 = arith.addf %14, %17 : vector<8x128xf32>
    %19 = vector.extract_strided_slice %2 {offsets = [0, 5], sizes = [8, 128], strides = [1, 1]} : vector<8x142xf32> to vector<8x128xf32>
    %cst_6 = arith.constant -0.0907574295 : f32
    %20 = vector.broadcast %cst_6 : f32 to vector<8x128xf32>
    %21 = arith.mulf %20, %19 : vector<8x128xf32>
    %22 = arith.addf %18, %21 : vector<8x128xf32>
    %23 = vector.extract_strided_slice %2 {offsets = [0, 6], sizes = [8, 128], strides = [1, 1]} : vector<8x142xf32> to vector<8x128xf32>
    %cst_7 = arith.constant 0.312955528 : f32
    %24 = vector.broadcast %cst_7 : f32 to vector<8x128xf32>
    %25 = arith.mulf %24, %23 : vector<8x128xf32>
    %26 = arith.addf %22, %25 : vector<8x128xf32>
    %27 = vector.extract_strided_slice %2 {offsets = [0, 7], sizes = [8, 128], strides = [1, 1]} : vector<8x142xf32> to vector<8x128xf32>
    %cst_8 = arith.constant 0.312955528 : f32
    %28 = vector.broadcast %cst_8 : f32 to vector<8x128xf32>
    %29 = arith.mulf %28, %27 : vector<8x128xf32>
    %30 = arith.addf %26, %29 : vector<8x128xf32>
    %31 = vector.extract_strided_slice %2 {offsets = [0, 8], sizes = [8, 128], strides = [1, 1]} : vector<8x142xf32> to vector<8x128xf32>
    %cst_9 = arith.constant -0.0907574295 : f32
    %32 = vector.broadcast %cst_9 : f32 to vector<8x128xf32>
    %33 = arith.mulf %32, %31 : vector<8x128xf32>
    %34 = arith.addf %30, %33 : vector<8x128xf32>
    %35 = vector.extract_strided_slice %2 {offsets = [0, 9], sizes = [8, 128], strides = [1, 1]} : vector<8x142xf32> to vector<8x128xf32>
    %cst_10 = arith.constant 0.0403464474 : f32
    %36 = vector.broadcast %cst_10 : f32 to vector<8x128xf32>
    %37 = arith.mulf %36, %35 : vector<8x128xf32>
    %38 = arith.addf %34, %37 : vector<8x128xf32>
    %39 = vector.extract_strided_slice %2 {offsets = [0, 10], sizes = [8, 128], strides = [1, 1]} : vector<8x142xf32> to vector<8x128xf32>
    %cst_11 = arith.constant -0.0171510316 : f32
    %40 = vector.broadcast %cst_11 : f32 to vector<8x128xf32>
    %41 = arith.mulf %40, %39 : vector<8x128xf32>
    %42 = arith.addf %38, %41 : vector<8x128xf32>
    %43 = vector.extract_strided_slice %2 {offsets = [0, 11], sizes = [8, 128], strides = [1, 1]} : vector<8x142xf32> to vector<8x128xf32>
    %cst_12 = arith.constant 0.00542291487 : f32
    %44 = vector.broadcast %cst_12 : f32 to vector<8x128xf32>
    %45 = arith.mulf %44, %43 : vector<8x128xf32>
    %46 = arith.addf %42, %45 : vector<8x128xf32>
    %47 = vector.extract_strided_slice %2 {offsets = [0, 12], sizes = [8, 128], strides = [1, 1]} : vector<8x142xf32> to vector<8x128xf32>
    %cst_13 = arith.constant -5.97594655E-4 : f32
    %48 = vector.broadcast %cst_13 : f32 to vector<8x128xf32>
    %49 = arith.mulf %48, %47 : vector<8x128xf32>
    %50 = arith.addf %46, %49 : vector<8x128xf32>
    %c1 = arith.constant 1 : index
    %c0_14 = arith.constant 0 : index
    %c0_15 = arith.constant 0 : index
    %51 = vector.load %arg1[%c1, %c0_14, %c0_15] : memref<2x8x142xf32, #tpu.memory_space<vmem>>, vector<1x8x142xf32>
    %52 = vector.shape_cast %51 : vector<1x8x142xf32> to vector<8x142xf32>
    %53 = vector.extract_strided_slice %52 {offsets = [0, 0], sizes = [8, 128], strides = [1, 1]} : vector<8x142xf32> to vector<8x128xf32>
    %cst_16 = arith.constant -1.22630695E-6 : f32
    %54 = vector.broadcast %cst_16 : f32 to vector<8x128xf32>
    %55 = arith.mulf %54, %53 : vector<8x128xf32>
    %56 = arith.addf %50, %55 : vector<8x128xf32>
    %57 = vector.extract_strided_slice %52 {offsets = [0, 1], sizes = [8, 128], strides = [1, 1]} : vector<8x142xf32> to vector<8x128xf32>
    %cst_17 = arith.constant 3.66886467E-4 : f32
    %58 = vector.broadcast %cst_17 : f32 to vector<8x128xf32>
    %59 = arith.mulf %58, %57 : vector<8x128xf32>
    %60 = arith.addf %56, %59 : vector<8x128xf32>
    %61 = vector.extract_strided_slice %52 {offsets = [0, 2], sizes = [8, 128], strides = [1, 1]} : vector<8x142xf32> to vector<8x128xf32>
    %cst_18 = arith.constant -0.00129220856 : f32
    %62 = vector.broadcast %cst_18 : f32 to vector<8x128xf32>
    %63 = arith.mulf %62, %61 : vector<8x128xf32>
    %64 = arith.addf %60, %63 : vector<8x128xf32>
    %65 = vector.extract_strided_slice %52 {offsets = [0, 3], sizes = [8, 128], strides = [1, 1]} : vector<8x142xf32> to vector<8x128xf32>
    %cst_19 = arith.constant 0.00253551081 : f32
    %66 = vector.broadcast %cst_19 : f32 to vector<8x128xf32>
    %67 = arith.mulf %66, %65 : vector<8x128xf32>
    %68 = arith.addf %64, %67 : vector<8x128xf32>
    %69 = vector.extract_strided_slice %52 {offsets = [0, 4], sizes = [8, 128], strides = [1, 1]} : vector<8x142xf32> to vector<8x128xf32>
    %cst_20 = arith.constant -0.00377012184 : f32
    %70 = vector.broadcast %cst_20 : f32 to vector<8x128xf32>
    %71 = arith.mulf %70, %69 : vector<8x128xf32>
    %72 = arith.addf %68, %71 : vector<8x128xf32>
    %73 = vector.extract_strided_slice %52 {offsets = [0, 5], sizes = [8, 128], strides = [1, 1]} : vector<8x142xf32> to vector<8x128xf32>
    %cst_21 = arith.constant 0.00467081042 : f32
    %74 = vector.broadcast %cst_21 : f32 to vector<8x128xf32>
    %75 = arith.mulf %74, %73 : vector<8x128xf32>
    %76 = arith.addf %72, %75 : vector<8x128xf32>
    %77 = vector.extract_strided_slice %52 {offsets = [0, 6], sizes = [8, 128], strides = [1, 1]} : vector<8x142xf32> to vector<8x128xf32>
    %cst_22 = arith.constant 4.950000e-01 : f32
    %78 = vector.broadcast %cst_22 : f32 to vector<8x128xf32>
    %79 = arith.mulf %78, %77 : vector<8x128xf32>
    %80 = arith.addf %76, %79 : vector<8x128xf32>
    %81 = vector.extract_strided_slice %52 {offsets = [0, 7], sizes = [8, 128], strides = [1, 1]} : vector<8x142xf32> to vector<8x128xf32>
    %cst_23 = arith.constant 0.00467081042 : f32
    %82 = vector.broadcast %cst_23 : f32 to vector<8x128xf32>
    %83 = arith.mulf %82, %81 : vector<8x128xf32>
    %84 = arith.addf %80, %83 : vector<8x128xf32>
    %85 = vector.extract_strided_slice %52 {offsets = [0, 8], sizes = [8, 128], strides = [1, 1]} : vector<8x142xf32> to vector<8x128xf32>
    %cst_24 = arith.constant -0.00377012184 : f32
    %86 = vector.broadcast %cst_24 : f32 to vector<8x128xf32>
    %87 = arith.mulf %86, %85 : vector<8x128xf32>
    %88 = arith.addf %84, %87 : vector<8x128xf32>
    %89 = vector.extract_strided_slice %52 {offsets = [0, 9], sizes = [8, 128], strides = [1, 1]} : vector<8x142xf32> to vector<8x128xf32>
    %cst_25 = arith.constant 0.00253551081 : f32
    %90 = vector.broadcast %cst_25 : f32 to vector<8x128xf32>
    %91 = arith.mulf %90, %89 : vector<8x128xf32>
    %92 = arith.addf %88, %91 : vector<8x128xf32>
    %93 = vector.extract_strided_slice %52 {offsets = [0, 10], sizes = [8, 128], strides = [1, 1]} : vector<8x142xf32> to vector<8x128xf32>
    %cst_26 = arith.constant -0.00129220856 : f32
    %94 = vector.broadcast %cst_26 : f32 to vector<8x128xf32>
    %95 = arith.mulf %94, %93 : vector<8x128xf32>
    %96 = arith.addf %92, %95 : vector<8x128xf32>
    %97 = vector.extract_strided_slice %52 {offsets = [0, 11], sizes = [8, 128], strides = [1, 1]} : vector<8x142xf32> to vector<8x128xf32>
    %cst_27 = arith.constant 3.66886467E-4 : f32
    %98 = vector.broadcast %cst_27 : f32 to vector<8x128xf32>
    %99 = arith.mulf %98, %97 : vector<8x128xf32>
    %100 = arith.addf %96, %99 : vector<8x128xf32>
    %101 = vector.extract_strided_slice %52 {offsets = [0, 12], sizes = [8, 128], strides = [1, 1]} : vector<8x142xf32> to vector<8x128xf32>
    %cst_28 = arith.constant -1.22630695E-6 : f32
    %102 = vector.broadcast %cst_28 : f32 to vector<8x128xf32>
    %103 = arith.mulf %102, %101 : vector<8x128xf32>
    %104 = arith.addf %100, %103 : vector<8x128xf32>
    %c0_29 = arith.constant 0 : index
    %c0_30 = arith.constant 0 : index
    %105 = vector.load %arg2[%c0_29, %c0_30] : memref<8x128xf32, #tpu.memory_space<vmem>>, vector<8x128xf32>
    tpu.vector_store %arg2[%c0_29, %c0_30], %104 {strides = array<i32>} : memref<8x128xf32, #tpu.memory_space<vmem>>, vector<8x128xf32>,
    return
  }
  func.func @transform_0(%arg0: i32) -> (i32, i32, i32) {
    %c0_i32 = arith.constant 0 : i32
    %c0_i32_0 = arith.constant 0 : i32
    %c0_i32_1 = arith.constant 0 : i32
    return %c0_i32, %arg0, %c0_i32_0 : i32, i32, i32
  }
  func.func @transform_1(%arg0: i32) -> (i32, i32) {
    %c0_i32 = arith.constant 0 : i32
    %c0_i32_0 = arith.constant 0 : i32
    return %arg0, %c0_i32 : i32, i32
  }
}

</mosaic_0001>

<llo_original>
// kernel: tpu_custom_call.1
$region0: #{tpu_custom_call.1}
  #allocation0 [shape = 'u32[]', space=smem, size = 0x4, offset = 0x4, fixed_abs, tag = 'smem constant byte address 0x4 - core index']
  #allocation1 [shape = 'u32[144,128]{1,0:T(1,128)}', space=vmem, size = 0x12000, scoped, tag = 'internal scratch']
  %s0 = inlined_call_operand.hbm [shape: f32[2,16,142], index: 0, kind: input, shape index: {}]
  %s1 = inlined_call_operand.hbm [shape: f32[16,128], index: 1, kind: output, shape index: {}]
  %s2 = sld [smem:[#allocation0]]
  $region41: #{tpu_custom_call.1} parent=0
    _
  %s4 = ssub.s32 1, %s2
  %s5 = scalar_select 0, %s4, %s2
  $region1: #{tpu_custom_call.1} parent=0
    #allocation2 [shape = 'u8[32768]{0}', space=vmem, size = 0x8000, scoped, tag = 'input window, operand 0']
    #allocation3 [shape = 's32[2]{0}', space=sflag, size = 0x8, scoped, tag = 'scoped memory for tpu_custom_call.1']
    #allocation4 [shape = 's32[2]{0}', space=sflag, size = 0x8, scoped, tag = 'scoped memory for tpu_custom_call.1']
    #allocation5 [shape = 'u8[8192]{0}', space=vmem, size = 0x2000, scoped, tag = 'output window, operand 0']
    %6 = vsyncpa [#allocation3], 0
    %s7 = scalar_lea.sflag [#allocation3], 1
    %8 = vsyncpa %s7, 0
    %9 = vsyncpa [#allocation4], 0
    %s10 = scalar_lea.sflag [#allocation4], 1
    %11 = vsyncpa %s10, 0
    loop: start=0, step=1, limit=4
    $region2: #{tpu_custom_call.1} parent=1 // loop_pre_header
      _
    $region3: #{tpu_custom_call.1} parent=1 // loop_header
      %s13 = sphi 0, %s17
      %p14 = scmp.ge.s32.totalorder %s13, 4
      %s23 = sphi 0, %s25
      %s26 = sphi 0, %s23
      %s27 = sphi 0, %s26
      %s43 = sphi 0, %s27
      %s49 = sphi 0, %s51
      %s52 = sphi 0, %s49
      %s53 = sphi 0, %s52
      %s69 = sphi 0, %s53
    $region4: #{tpu_custom_call.1} parent=1 // loop_header_branch
      %16 = sbr.rel (%p14) target = $region8
    $region5: #{tpu_custom_call.1} parent=1 // loop_body
      %s18 = ssub.s32 %s13, 1
      %s19 = ssub.s32 %s13, 2
      %s20 = sadd.s32 %s13, 1
      %s21 = ssub.s32 %s13, %s20
      %p22 = scmp.eq.s32.totalorder %s21, 0
      %s24 = sadd.s32 %s23, 1
      %s25 = scalar_select %p22, %s23, %s24
      %p28 = pneg %p22
      %p29 = scmp.eq.s32.totalorder %s13, 1
      %p30 = por %p28, %p29
      %p31 = scmp.ne.s32.totalorder %s23, %s26
      %p32 = scmp.eq.s32.totalorder %s13, 0
      %p33 = por %p31, %p32
      %p34 = scmp.ne.s32.totalorder %s23, %s26
      %p35 = scmp.eq.s32.totalorder %s18, 1
      %p36 = por %p34, %p35
      %p37 = scmp.ne.s32.totalorder %s26, %s27
      %p38 = scmp.eq.s32.totalorder %s18, 0
      %p39 = por %p37, %p38
      %p40 = scmp.ne.s32.totalorder %s26, %s27
      %p41 = scmp.eq.s32.totalorder %s19, 1
      %p42 = por %p40, %p41
      %p44 = scmp.ne.s32.totalorder %s27, %s43
      %p45 = scmp.eq.s32.totalorder %s19, 0
      %p46 = por %p44, %p45
      %s47 = ssub.s32 %s13, %s20
      %p48 = scmp.eq.s32.totalorder %s47, 0
      %s50 = sadd.s32 %s49, 1
      %s51 = scalar_select %p48, %s49, %s50
      %p54 = pneg %p48
      %p55 = scmp.eq.s32.totalorder %s13, 1
      %p56 = por %p54, %p55
      %p57 = scmp.ne.s32.totalorder %s49, %s52
      %p58 = scmp.eq.s32.totalorder %s13, 0
      %p59 = por %p57, %p58
      %p60 = scmp.ne.s32.totalorder %s49, %s52
      %p61 = scmp.eq.s32.totalorder %s18, 1
      %p62 = por %p60, %p61
      %p63 = scmp.ne.s32.totalorder %s52, %s53
      %p64 = scmp.eq.s32.totalorder %s18, 0
      %p65 = por %p63, %p64
      %p66 = scmp.ne.s32.totalorder %s52, %s53
      %p67 = scmp.eq.s32.totalorder %s19, 1
      %p68 = por %p66, %p67
      %p70 = scmp.ne.s32.totalorder %s53, %s69
      %p71 = scmp.eq.s32.totalorder %s19, 0
      %p72 = por %p70, %p71
      %p73 = scmp.le.s32.totalorder 1, %s13
      %p74 = scmp.lt.s32.totalorder %s13, 3
      %p75 = pnand %p73, %p74
      %p76 = pneg %p75
      // Predicated region
      $region9: #{tpu_custom_call.1} parent=5 // pred_check
        _
      $region10: #{tpu_custom_call.1} parent=5 // pred_check_branch
        %78 = sbr.rel (%p75) target = $region12
      $region11: #{tpu_custom_call.1} parent=5 // pred_region
        %s79 = ssub.s32 %s13, 1
      $region12: #{tpu_custom_call.1} parent=5 // pred_fallthru
        _
      %p80 = scmp.lt.s32.totalorder %s13, 2
      // Predicated region
      $region13: #{tpu_custom_call.1} parent=5 // pred_check
        %p81 = pneg %p80
      $region14: #{tpu_custom_call.1} parent=5 // pred_check_branch
        %83 = sbr.rel (%p81) target = $region16
      $region15: #{tpu_custom_call.1} parent=5 // pred_region
        // Predicated region
        $region17: #{tpu_custom_call.1} parent=15 // pred_check
          %p84 = pneg %p33
        $region18: #{tpu_custom_call.1} parent=15 // pred_check_branch
          %86 = sbr.rel (%p84) target = $region20
        $region19: #{tpu_custom_call.1} parent=15 // pred_region
          %s87 = sand.u32 %s23, 1
          %s88 = scalar_lea.sflag [#allocation3], %s87
          %s89 = sand.u32 %s23, 1
          %s90 = smul.addr %s89, 32
          %s91 = scalar_lea.vmem [#allocation2], %s90
          %s93 = ssub.s32 512, 512
          %94 = vsyncadd %s88, %s93
          %s95 = smul.addr %s13, 2
          %s96 = smul.addr %s95, 128
          %s97 = scalar_lea.hbm %s0, %s96
          %s98 = sshll.u32 %s91, 4
          %s99 = int_to_ptr.vmem [resolvable:$true] %s98
          %104 = dma.hbm_to_vmem [thread:$0]  %s97, 512, %s99, %s88, 512, 256, 16
        $region20: #{tpu_custom_call.1} parent=15 // pred_fallthru
          _
      $region16: #{tpu_custom_call.1} parent=5 // pred_fallthru
        _
      %p105 = scmp.le.s32.totalorder 1, %s13
      %p106 = scmp.lt.s32.totalorder %s13, 3
      %p107 = pnand %p105, %p106
      %p108 = pneg %p107
      // Predicated region
      $region21: #{tpu_custom_call.1} parent=5 // pred_check
        _
      $region22: #{tpu_custom_call.1} parent=5 // pred_check_branch
        %110 = sbr.rel (%p107) target = $region24
      $region23: #{tpu_custom_call.1} parent=5 // pred_region
        %s111 = ssub.s32 %s13, 1
        %s112 = sand.u32 %s26, 1
        %s113 = scalar_lea.sflag [#allocation3], %s112
        %s114 = sand.u32 %s26, 1
        %s115 = smul.addr %s114, 32
        %s116 = scalar_lea.vmem [#allocation2], %s115
        // Predicated region
        $region25: #{tpu_custom_call.1} parent=23 // pred_check
          %p117 = pneg %p39
        $region26: #{tpu_custom_call.1} parent=23 // pred_check_branch
          %119 = sbr.rel (%p117) target = $region28
        $region27: #{tpu_custom_call.1} parent=23 // pred_region
          %120 = dma.done %s113, 512
        $region28: #{tpu_custom_call.1} parent=23 // pred_fallthru
          _
        %s121 = sand.u32 %s26, 1
        %s122 = scalar_lea.sflag [#allocation3], %s121
        %s123 = sand.u32 %s26, 1
        %s124 = smul.addr %s123, 32
        %s125 = scalar_lea.vmem [#allocation2], %s124
        %p126 = pneg %p39
        %p127 = pneg %p36
        %p128 = pneg %p65
        %p129 = pneg %p62
        %s130 = sand.u32 %s52, 1
        %s131 = scalar_lea.sflag [#allocation4], %s130
        %s132 = sand.u32 %s52, 1
        %s133 = smul.addr %s132, 8
        %s134 = scalar_lea.vmem [#allocation5], %s133
        %v135 = vld [vmem:[%s116] sm:$0xff]
        %v136 = vld [vmem:[%s116 + $0x8] sm:$0xff]
        %v137 = vmul.f32 %v135, -0.00059759466
        %v138 = vmul.f32 %v136, -0.00059759466
        %v139 = vadd.f32 %v137, 0.0
        %v140 = vadd.f32 %v138, 0.0
        %v141 = vmul.f32 %v135, 0.005422915
        %v142 = vmul.f32 %v136, 0.005422915
        %145 = vrot.lane.b32.xlu0 %v141, 127
        %v146 = vpop.permute.xlu0 %145
        %147 = vrot.lane.b32.xlu0 %v142, 127
        %v148 = vpop.permute.xlu0 %147
        %vm149 = vcmask 1039360
        %v150 = vsel %vm149, %v146, %v148
        %v153 = vadd.f32 %v139, %v150
        %v154 = vadd.f32 %v140, %v148
        %v155 = vmul.f32 %v135, -0.017151032
        %v156 = vmul.f32 %v136, -0.017151032
        %159 = vrot.lane.b32.xlu0 %v155, 126
        %v160 = vpop.permute.xlu0 %159
        %161 = vrot.lane.b32.xlu0 %v156, 126
        %v162 = vpop.permute.xlu0 %161
        %vm163 = vcmask 1031168
        %v164 = vsel %vm163, %v160, %v162
        %v167 = vadd.f32 %v153, %v164
        %v168 = vadd.f32 %v154, %v162
        %v169 = vmul.f32 %v135, 0.040346447
        %v170 = vmul.f32 %v136, 0.040346447
        %173 = vrot.lane.b32.xlu0 %v169, 125
        %v174 = vpop.permute.xlu0 %173
        %175 = vrot.lane.b32.xlu0 %v170, 125
        %v176 = vpop.permute.xlu0 %175
        %vm177 = vcmask 1022976
        %v178 = vsel %vm177, %v174, %v176
        %v181 = vadd.f32 %v167, %v178
        %v182 = vadd.f32 %v168, %v176
        %v183 = vmul.f32 %v135, -0.09075743
        %v184 = vmul.f32 %v136, -0.09075743
        %187 = vrot.lane.b32.xlu0 %v183, 124
        %v188 = vpop.permute.xlu0 %187
        %189 = vrot.lane.b32.xlu0 %v184, 124
        %v190 = vpop.permute.xlu0 %189
        %vm191 = vcmask 1014784
        %v192 = vsel %vm191, %v188, %v190
        %v195 = vadd.f32 %v181, %v192
        %v196 = vadd.f32 %v182, %v190
        %v197 = vmul.f32 %v135, 0.31295553
        %v198 = vmul.f32 %v136, 0.31295553
        %201 = vrot.lane.b32.xlu0 %v197, 123
        %v202 = vpop.permute.xlu0 %201
        %203 = vrot.lane.b32.xlu0 %v198, 123
        %v204 = vpop.permute.xlu0 %203
        %vm205 = vcmask 1006592
        %v206 = vsel %vm205, %v202, %v204
        %v209 = vadd.f32 %v195, %v206
        %v210 = vadd.f32 %v196, %v204
        %211 = vrot.lane.b32.xlu0 %v197, 122
        %v212 = vpop.permute.xlu0 %211
        %213 = vrot.lane.b32.xlu0 %v198, 122
        %v214 = vpop.permute.xlu0 %213
        %vm215 = vcmask 998400
        %v216 = vsel %vm215, %v212, %v214
        %v219 = vadd.f32 %v209, %v216
        %v220 = vadd.f32 %v210, %v214
        %221 = vrot.lane.b32.xlu0 %v183, 121
        %v222 = vpop.permute.xlu0 %221
        %223 = vrot.lane.b32.xlu0 %v184, 121
        %v224 = vpop.permute.xlu0 %223
        %vm225 = vcmask 990208
        %v226 = vsel %vm225, %v222, %v224
        %v229 = vadd.f32 %v219, %v226
        %v230 = vadd.f32 %v220, %v224
        %231 = vrot.lane.b32.xlu0 %v169, 120
        %v232 = vpop.permute.xlu0 %231
        %233 = vrot.lane.b32.xlu0 %v170, 120
        %v234 = vpop.permute.xlu0 %233
        %vm235 = vcmask 982016
        %v236 = vsel %vm235, %v232, %v234
        %v239 = vadd.f32 %v229, %v236
        %v240 = vadd.f32 %v230, %v234
        %241 = vrot.lane.b32.xlu0 %v155, 119
        %v242 = vpop.permute.xlu0 %241
        %243 = vrot.lane.b32.xlu0 %v156, 119
        %v244 = vpop.permute.xlu0 %243
        %vm245 = vcmask 973824
        %v246 = vsel %vm245, %v242, %v244
        %v249 = vadd.f32 %v239, %v246
        %v250 = vadd.f32 %v240, %v244
        %251 = vrot.lane.b32.xlu0 %v141, 118
        %v252 = vpop.permute.xlu0 %251
        %253 = vrot.lane.b32.xlu0 %v142, 118
        %v254 = vpop.permute.xlu0 %253
        %vm255 = vcmask 965632
        %v256 = vsel %vm255, %v252, %v254
        %v259 = vadd.f32 %v249, %v256
        %v260 = vadd.f32 %v250, %v254
        %263 = vrot.lane.b32.xlu0 %v137, 117
        %v264 = vpop.permute.xlu0 %263
        %265 = vrot.lane.b32.xlu0 %v138, 117
        %v266 = vpop.permute.xlu0 %265
        %vm267 = vcmask 957440
        %v268 = vsel %vm267, %v264, %v266
        %v271 = vadd.f32 %v259, %v268
        %v272 = vadd.f32 %v260, %v266
        %s273 = scalar_lea.vmem %s116, 16 [#allocation2]
        %v274 = vld [vmem:[%s273] sm:$0xff]
        %v275 = vld [vmem:[%s273 + $0x8] sm:$0xff]
        %v276 = vmul.f32 %v274, -1.226307e-06
        %278 = vrot.lane.b32.xlu0 %v276, 1
        %v279 = vpop.permute.xlu0 %278
        %v281 = vadd.f32 %v271, %v279
        %v282 = vadd.f32 %v272, %v279
        %v283 = vmul.f32 %v274, 0.00036688647
        %v284 = vmul.f32 %v275, 0.00036688647
        %v285 = vadd.f32 %v281, %v283
        %v286 = vadd.f32 %v282, %v284
        %v287 = vmul.f32 %v274, -0.0012922086
        %v288 = vmul.f32 %v275, -0.0012922086
        %291 = vrot.lane.b32.xlu0 %v287, 127
        %v292 = vpop.permute.xlu0 %291
        %293 = vrot.lane.b32.xlu0 %v288, 127
        %v294 = vpop.permute.xlu0 %293
        %v295 = vsel %vm149, %v292, %v294
        %v298 = vadd.f32 %v285, %v295
        %v299 = vadd.f32 %v286, %v294
        %v300 = vmul.f32 %v274, 0.0025355108
        %v301 = vmul.f32 %v275, 0.0025355108
        %304 = vrot.lane.b32.xlu0 %v300, 126
        %v305 = vpop.permute.xlu0 %304
        %306 = vrot.lane.b32.xlu0 %v301, 126
        %v307 = vpop.permute.xlu0 %306
        %v308 = vsel %vm163, %v305, %v307
        %v311 = vadd.f32 %v298, %v308
        %v312 = vadd.f32 %v299, %v307
        %v313 = vmul.f32 %v274, -0.0037701218
        %v314 = vmul.f32 %v275, -0.0037701218
        %317 = vrot.lane.b32.xlu0 %v313, 125
        %v318 = vpop.permute.xlu0 %317
        %319 = vrot.lane.b32.xlu0 %v314, 125
        %v320 = vpop.permute.xlu0 %319
        %v321 = vsel %vm177, %v318, %v320
        %v324 = vadd.f32 %v311, %v321
        %v325 = vadd.f32 %v312, %v320
        %v326 = vmul.f32 %v274, 0.0046708104
        %v327 = vmul.f32 %v275, 0.0046708104
        %330 = vrot.lane.b32.xlu0 %v326, 124
        %v331 = vpop.permute.xlu0 %330
        %332 = vrot.lane.b32.xlu0 %v327, 124
        %v333 = vpop.permute.xlu0 %332
        %v334 = vsel %vm191, %v331, %v333
        %v337 = vadd.f32 %v324, %v334
        %v338 = vadd.f32 %v325, %v333
        %v339 = vmul.f32 %v274, 0.495
        %v340 = vmul.f32 %v275, 0.495
        %343 = vrot.lane.b32.xlu0 %v339, 123
        %v344 = vpop.permute.xlu0 %343
        %345 = vrot.lane.b32.xlu0 %v340, 123
        %v346 = vpop.permute.xlu0 %345
        %v347 = vsel %vm205, %v344, %v346
        %v350 = vadd.f32 %v337, %v347
        %v351 = vadd.f32 %v338, %v346
        %352 = vrot.lane.b32.xlu0 %v326, 122
        %v353 = vpop.permute.xlu0 %352
        %354 = vrot.lane.b32.xlu0 %v327, 122
        %v355 = vpop.permute.xlu0 %354
        %v356 = vsel %vm215, %v353, %v355
        %v359 = vadd.f32 %v350, %v356
        %v360 = vadd.f32 %v351, %v355
        %361 = vrot.lane.b32.xlu0 %v313, 121
        %v362 = vpop.permute.xlu0 %361
        %363 = vrot.lane.b32.xlu0 %v314, 121
        %v364 = vpop.permute.xlu0 %363
        %v365 = vsel %vm225, %v362, %v364
        %v368 = vadd.f32 %v359, %v365
        %v369 = vadd.f32 %v360, %v364
        %370 = vrot.lane.b32.xlu0 %v300, 120
        %v371 = vpop.permute.xlu0 %370
        %372 = vrot.lane.b32.xlu0 %v301, 120
        %v373 = vpop.permute.xlu0 %372
        %v374 = vsel %vm235, %v371, %v373
        %v377 = vadd.f32 %v368, %v374
        %v378 = vadd.f32 %v369, %v373
        %379 = vrot.lane.b32.xlu0 %v287, 119
        %v380 = vpop.permute.xlu0 %379
        %381 = vrot.lane.b32.xlu0 %v288, 119
        %v382 = vpop.permute.xlu0 %381
        %v383 = vsel %vm245, %v380, %v382
        %v386 = vadd.f32 %v377, %v383
        %v387 = vadd.f32 %v378, %v382
        %390 = vrot.lane.b32.xlu0 %v283, 118
        %v391 = vpop.permute.xlu0 %390
        %392 = vrot.lane.b32.xlu0 %v284, 118
        %v393 = vpop.permute.xlu0 %392
        %v394 = vsel %vm255, %v391, %v393
        %v397 = vadd.f32 %v386, %v394
        %v398 = vadd.f32 %v387, %v393
        %v399 = vmul.f32 %v275, -1.226307e-06
        %401 = vrot.lane.b32.xlu0 %v276, 117
        %v402 = vpop.permute.xlu0 %401
        %403 = vrot.lane.b32.xlu0 %v399, 117
        %v404 = vpop.permute.xlu0 %403
        %v405 = vsel %vm267, %v402, %v404
        %v408 = vadd.f32 %v397, %v405
        %v409 = vadd.f32 %v398, %v404
        %412 = vrot.lane.b32.xlu0 %v408, 127
        %v413 = vpop.permute.xlu0 %412
        %414 = vrot.lane.b32.xlu0 %v409, 127
        %v415 = vpop.permute.xlu0 %414
        %v416 = vsel %vm149, %v413, %v415
        %418 = vst [vmem:[%s134] sm:$0xff] %v416
        %s419 = sand.u32 %s52, 1
        %s420 = scalar_lea.sflag [#allocation4], %s419
        %s421 = sand.u32 %s52, 1
        %s422 = smul.addr %s421, 8
        %s423 = scalar_lea.vmem [#allocation5], %s422
        // Predicated region
        $region29: #{tpu_custom_call.1} parent=23 // pred_check
          %p424 = pneg %p62
        $region30: #{tpu_custom_call.1} parent=23 // pred_check_branch
          %426 = sbr.rel (%p424) target = $region32
        $region31: #{tpu_custom_call.1} parent=23 // pred_region
          %s428 = ssub.s32 128, 128
          %429 = vsyncadd %s420, %s428
          %s430 = smul.addr %s18, 128
          %s431 = scalar_lea.hbm %s1, %s430
          %s433 = sshll.u32 %s423, 4
          %s434 = int_to_ptr.vmem [resolvable:$true] %s433
          %436 = dma.vmem_to_hbm [thread:$0]  %s434, 128, %s431, %s420
        $region32: #{tpu_custom_call.1} parent=23 // pred_fallthru
          _
      $region24: #{tpu_custom_call.1} parent=5 // pred_fallthru
        _
      %p437 = scmp.le.s32.totalorder 2, %s13
      // Predicated region
      $region33: #{tpu_custom_call.1} parent=5 // pred_check
        %p438 = pneg %p437
      $region34: #{tpu_custom_call.1} parent=5 // pred_check_branch
        %440 = sbr.rel (%p438) target = $region36
      $region35: #{tpu_custom_call.1} parent=5 // pred_region
        %s441 = ssub.s32 %s13, 2
        // Predicated region
        $region37: #{tpu_custom_call.1} parent=35 // pred_check
          %p442 = pneg %p68
        $region38: #{tpu_custom_call.1} parent=35 // pred_check_branch
          %444 = sbr.rel (%p442) target = $region40
        $region39: #{tpu_custom_call.1} parent=35 // pred_region
          %s445 = sand.u32 %s53, 1
          %s446 = scalar_lea.sflag [#allocation4], %s445
          %s447 = sand.u32 %s53, 1
          %s448 = smul.addr %s447, 8
          %s449 = scalar_lea.vmem [#allocation5], %s448
          %450 = dma.done %s446, 128
        $region40: #{tpu_custom_call.1} parent=35 // pred_fallthru
          _
      $region36: #{tpu_custom_call.1} parent=5 // pred_fallthru
        _
    $region6: #{tpu_custom_call.1} parent=1 // loop_footer
      %s17 = sadd.s32 1, %s13
    $region7: #{tpu_custom_call.1} parent=1 // loop_footer_branch
      %12 = sbr.rel target = $region3
    $region8: #{tpu_custom_call.1} parent=1 // loop_exit
      _
    %451 = vsyncpa [#allocation3], 1
    %s452 = scalar_lea.sflag [#allocation3], 1
    %453 = vsyncpa %s452, 1
    %454 = vsyncpa [#allocation4], 1
    %s455 = scalar_lea.sflag [#allocation4], 1
    %456 = vsyncpa %s455, 1

</llo_original>
